<compile_context>
chip_gen: v7x
topology: tpu7x:2x2x1
jax: 0.10.0
libtpu: 0.0.40
codegen_flags: <defaults>
</compile_context>

<pallas_src>
import jax
import jax.numpy as jnp
from jax import lax
from jax.experimental import pallas as pl
from jax.experimental.pallas import tpu as pltpu


def _gate_kernel(a_ref, b_ref, wa_ref, wb_ref, bias_ref, oa_ref, ob_ref):
    # a_ref / b_ref : (TB, half)        batch tile of each embedding
    # wa_ref/wb_ref : (hidden, half)    nn.Linear weight, split, NOT transposed
    # bias_ref      : (1, hidden)
    # oa_ref/ob_ref : (TB, 1)           gate weights for softmax columns 0 / 1
    dn = (((1,), (1,)), ((), ()))  # contract act dim-1 with W dim-1 -> (TB, hidden)
    logits = lax.dot_general(
        a_ref[...], wa_ref[...], dn, preferred_element_type=jnp.float32
    )
    logits = logits + lax.dot_general(
        b_ref[...], wb_ref[...], dn, preferred_element_type=jnp.float32
    )
    logits = logits + bias_ref[...]

    # Numerically stable softmax along the hidden (lane) axis, all in f32.
    m = jnp.max(logits, axis=-1, keepdims=True)
    e = jnp.exp(logits - m)
    denom = jnp.sum(e, axis=-1, keepdims=True)
    probs = e / denom

    # Only columns 0 and 1 are consumed downstream: store just those.
    oa_ref[...] = probs[:, 0:1].astype(oa_ref.dtype)
    ob_ref[...] = probs[:, 1:2].astype(ob_ref.dtype)


def linear_gate_network(embedding_A, embedding_B, weight, bias):
    """embedding_A/B: (B, input_dim // 2) each; weight: (hidden, input_dim) in
    nn.Linear layout; bias: (hidden,). Returns (weight_A, weight_B), (B, 1)."""
    B, half = embedding_A.shape
    hidden = weight.shape[0]

    # Split the Linear weight to match the (implicit) concat; no transpose.
    w_a = weight[:, :half]           # (hidden, half)
    w_b = weight[:, half:]           # (hidden, half)
    b2d = bias.reshape(1, hidden)    # (1, hidden)

    # Batch tile: whole batch when small (block == full dim, so no (8,128)
    # divisibility constraint); otherwise a large 8/128-aligned tile so the
    # activation DMAs pipeline.  VMEM use per tile is tiny either way.
    tb = B if B <= 1024 else 1024
    grid = (pl.cdiv(B, tb),)

    out_a, out_b = pl.pallas_call(
        _gate_kernel,
        out_shape=(
            jax.ShapeDtypeStruct((B, 1), jnp.float32),
            jax.ShapeDtypeStruct((B, 1), jnp.float32),
        ),
        grid=grid,
        in_specs=[
            pl.BlockSpec((tb, half), lambda i: (i, 0)),       # embedding_A tile
            pl.BlockSpec((tb, half), lambda i: (i, 0)),       # embedding_B tile
            pl.BlockSpec((hidden, half), lambda i: (0, 0)),   # W_A (resident)
            pl.BlockSpec((hidden, half), lambda i: (0, 0)),   # W_B (resident)
            pl.BlockSpec((1, hidden), lambda i: (0, 0)),      # bias (resident)
        ],
        out_specs=(
            pl.BlockSpec((tb, 1), lambda i: (i, 0)),
            pl.BlockSpec((tb, 1), lambda i: (i, 0)),
        ),
        compiler_params=pltpu.CompilerParams(
            dimension_semantics=("parallel",),  # shard batch tiles across TCs
        ),
    )(embedding_A, embedding_B, w_a, w_b, b2d)

    return out_a, out_b


if __name__ == "__main__":
    # Small deterministic example consistent with the module:
    #   embedding_A, embedding_B: (batch, input_dim // 2) each.
    batch = 8
    input_dim = 32
    hidden = input_dim // 2

    key = jax.random.PRNGKey(0)
    k_a, k_b, k_w, k_bias = jax.random.split(key, 4)

    embedding_A = jax.random.normal(k_a, (batch, input_dim // 2), dtype=jnp.float32)
    embedding_B = jax.random.normal(k_b, (batch, input_dim // 2), dtype=jnp.float32)

    # Deterministic Linear init mirroring nn.Linear's default uniform range.
    bound = 1.0 / jnp.sqrt(jnp.float32(input_dim))
    weight = jax.random.uniform(
        k_w, (hidden, input_dim), dtype=jnp.float32, minval=-bound, maxval=bound
    )
    bias = jax.random.uniform(
        k_bias, (hidden,), dtype=jnp.float32, minval=-bound, maxval=bound
    )

    weight_A, weight_B = jax.jit(linear_gate_network)(
        embedding_A, embedding_B, weight, bias
    )
    jax.block_until_ready((weight_A, weight_B))

    # Sanity check against a plain-JAX reference of the PyTorch forward.
    combined = jnp.concatenate([embedding_A, embedding_B], axis=1)
    ref = jax.nn.softmax(combined @ weight.T + bias, axis=1)
    assert weight_A.shape == (batch, 1) and weight_B.shape == (batch, 1)
    assert jnp.allclose(weight_A, ref[:, 0:1], atol=1e-5, rtol=1e-5)
    assert jnp.allclose(weight_B, ref[:, 1:2], atol=1e-5, rtol=1e-5)

    print("KERNEL_OK")
</pallas_src>

<mosaic_0001>
module attributes {stable_mosaic.version = 11 : i64} {
  func.func @_gate_kernel(%arg0: i32, %arg1: memref<8x16xf32, #tpu.memory_space<vmem>>, %arg2: memref<8x16xf32, #tpu.memory_space<vmem>>, %arg3: memref<16x16xf32, #tpu.memory_space<vmem>>, %arg4: memref<16x16xf32, #tpu.memory_space<vmem>>, %arg5: memref<1x16xf32, #tpu.memory_space<vmem>>, %arg6: memref<8x1xf32, #tpu.memory_space<vmem>>, %arg7: memref<8x1xf32, #tpu.memory_space<vmem>>) attributes {dimension_semantics = [#tpu.dimension_semantics<parallel>], iteration_bounds = array<i64: 1>, scalar_prefetch = 0 : i64, scratch_operands = 0 : i64, tpu.core_type = #tpu.core_type<tc>, window_params = [{transform_indices = @transform_0, window_bounds = array<i64: 8, 16>}, {transform_indices = @transform_1, window_bounds = array<i64: 8, 16>}, {pipeline_mode = #tpu.pipeline_mode<synchronous>, transform_indices = @transform_2, window_bounds = array<i64: 16, 16>}, {pipeline_mode = #tpu.pipeline_mode<synchronous>, transform_indices = @transform_3, window_bounds = array<i64: 16, 16>}, {pipeline_mode = #tpu.pipeline_mode<synchronous>, transform_indices = @transform_4, window_bounds = array<i64: 1, 16>}, {transform_indices = @transform_5, window_bounds = array<i64: 8, 1>}, {transform_indices = @transform_6, window_bounds = array<i64: 8, 1>}]} {
    %c0 = arith.constant 0 : index
    %c0_0 = arith.constant 0 : index
    %0 = vector.load %arg1[%c0, %c0_0] : memref<8x16xf32, #tpu.memory_space<vmem>>, vector<8x16xf32>
    %c0_1 = arith.constant 0 : index
    %c0_2 = arith.constant 0 : index
    %1 = vector.load %arg3[%c0_1, %c0_2] : memref<16x16xf32, #tpu.memory_space<vmem>>, vector<16x16xf32>
    %cst = arith.constant dense<0.000000e+00> : vector<8x16xf32>
    %2 = tpu.matmul %0, %1, %cst {dimension_numbers = #tpu.dot_dimension_numbers<[1], [1], [0], [0], [0, 0, 1, 0], [], []>} : vector<8x16xf32>, vector<16x16xf32>, vector<8x16xf32> -> vector<8x16xf32>
    %c0_3 = arith.constant 0 : index
    %c0_4 = arith.constant 0 : index
    %3 = vector.load %arg2[%c0_3, %c0_4] : memref<8x16xf32, #tpu.memory_space<vmem>>, vector<8x16xf32>
    %c0_5 = arith.constant 0 : index
    %c0_6 = arith.constant 0 : index
    %4 = vector.load %arg4[%c0_5, %c0_6] : memref<16x16xf32, #tpu.memory_space<vmem>>, vector<16x16xf32>
    %cst_7 = arith.constant dense<0.000000e+00> : vector<8x16xf32>
    %5 = tpu.matmul %3, %4, %cst_7 {dimension_numbers = #tpu.dot_dimension_numbers<[1], [1], [0], [0], [0, 0, 1, 0], [], []>} : vector<8x16xf32>, vector<16x16xf32>, vector<8x16xf32> -> vector<8x16xf32>
    %6 = arith.addf %2, %5 : vector<8x16xf32>
    %c0_8 = arith.constant 0 : index
    %c0_9 = arith.constant 0 : index
    %7 = vector.load %arg5[%c0_8, %c0_9] : memref<1x16xf32, #tpu.memory_space<vmem>>, vector<1x16xf32>
    %8 = vector.broadcast %7 : vector<1x16xf32> to vector<8x16xf32>
    %9 = arith.addf %6, %8 : vector<8x16xf32>
    %cst_10 = arith.constant dense<0xFF800000> : vector<8xf32>
    %10 = vector.multi_reduction <maximumf>, %9, %cst_10 [1] : vector<8x16xf32> to vector<8xf32>
    %11 = vector.shape_cast %10 : vector<8xf32> to vector<8x1xf32>
    %12 = vector.broadcast %11 : vector<8x1xf32> to vector<8x16xf32>
    %13 = arith.subf %9, %12 : vector<8x16xf32>
    %14 = math.exp %13 : vector<8x16xf32>
    %cst_11 = arith.constant dense<0.000000e+00> : vector<8xf32>
    %15 = vector.multi_reduction <add>, %14, %cst_11 [1] : vector<8x16xf32> to vector<8xf32>
    %16 = vector.shape_cast %15 : vector<8xf32> to vector<8x1xf32>
    %17 = vector.broadcast %16 : vector<8x1xf32> to vector<8x16xf32>
    %18 = arith.divf %14, %17 : vector<8x16xf32>
    %19 = vector.extract_strided_slice %18 {offsets = [0, 0], sizes = [8, 1], strides = [1, 1]} : vector<8x16xf32> to vector<8x1xf32>
    %c0_12 = arith.constant 0 : index
    %c0_13 = arith.constant 0 : index
    %20 = vector.load %arg6[%c0_12, %c0_13] : memref<8x1xf32, #tpu.memory_space<vmem>>, vector<8x1xf32>
    tpu.vector_store %arg6[%c0_12, %c0_13], %19 {strides = array<i32>} : memref<8x1xf32, #tpu.memory_space<vmem>>, vector<8x1xf32>,
    %21 = vector.extract_strided_slice %18 {offsets = [0, 1], sizes = [8, 1], strides = [1, 1]} : vector<8x16xf32> to vector<8x1xf32>
    %c0_14 = arith.constant 0 : index
    %c0_15 = arith.constant 0 : index
    %22 = vector.load %arg7[%c0_14, %c0_15] : memref<8x1xf32, #tpu.memory_space<vmem>>, vector<8x1xf32>
    tpu.vector_store %arg7[%c0_14, %c0_15], %21 {strides = array<i32>} : memref<8x1xf32, #tpu.memory_space<vmem>>, vector<8x1xf32>,
    return
  }
  func.func @transform_0(%arg0: i32) -> (i32, i32) {
    %c0_i32 = arith.constant 0 : i32
    %c0_i32_0 = arith.constant 0 : i32
    return %arg0, %c0_i32 : i32, i32
  }
  func.func @transform_1(%arg0: i32) -> (i32, i32) {
    %c0_i32 = arith.constant 0 : i32
    %c0_i32_0 = arith.constant 0 : i32
    return %arg0, %c0_i32 : i32, i32
  }
  func.func @transform_2(%arg0: i32) -> (i32, i32) {
    %c0_i32 = arith.constant 0 : i32
    %c0_i32_0 = arith.constant 0 : i32
    %c0_i32_1 = arith.constant 0 : i32
    return %c0_i32, %c0_i32_0 : i32, i32
  }
  func.func @transform_3(%arg0: i32) -> (i32, i32) {
    %c0_i32 = arith.constant 0 : i32
    %c0_i32_0 = arith.constant 0 : i32
    %c0_i32_1 = arith.constant 0 : i32
    return %c0_i32, %c0_i32_0 : i32, i32
  }
  func.func @transform_4(%arg0: i32) -> (i32, i32) {
    %c0_i32 = arith.constant 0 : i32
    %c0_i32_0 = arith.constant 0 : i32
    %c0_i32_1 = arith.constant 0 : i32
    return %c0_i32, %c0_i32_0 : i32, i32
  }
  func.func @transform_5(%arg0: i32) -> (i32, i32) {
    %c0_i32 = arith.constant 0 : i32
    %c0_i32_0 = arith.constant 0 : i32
    return %arg0, %c0_i32 : i32, i32
  }
  func.func @transform_6(%arg0: i32) -> (i32, i32) {
    %c0_i32 = arith.constant 0 : i32
    %c0_i32_0 = arith.constant 0 : i32
    return %arg0, %c0_i32 : i32, i32
  }
}

</mosaic_0001>

<llo_original>
// kernel: linear_gate_network.1
$region0: #{linear_gate_network.1}
  #allocation0 [shape = 'u32[]', space=smem, size = 0x4, offset = 0x4, fixed_abs, tag = 'smem constant byte address 0x4 - core index']
  #allocation1 [shape = 'u32[144,128]{1,0:T(1,128)}', space=vmem, size = 0x12000, scoped, tag = 'internal scratch']
  %s0 = inlined_call_operand.vmem [shape: f32[8,16], index: 0, kind: input, shape index: {}]
  %s1 = inlined_call_operand.vmem [shape: f32[8,16], index: 1, kind: input, shape index: {}]
  %s2 = inlined_call_operand.vmem [shape: f32[16,16], index: 2, kind: input, shape index: {}]
  %s3 = inlined_call_operand.vmem [shape: f32[16,16], index: 3, kind: input, shape index: {}]
  %s4 = inlined_call_operand.vmem [shape: f32[1,16], index: 4, kind: input, shape index: {}]
  %s5 = inlined_call_operand.vmem [shape: f32[8,1], index: 5, kind: output, shape index: {0}]
  %s6 = inlined_call_operand.vmem [shape: f32[8,1], index: 6, kind: output, shape index: {1}]
  %7 = xla_tuple %s5, %s6
  %s8 = sld [smem:[#allocation0]]
  $region38: #{linear_gate_network.1} parent=0
    _
  %s10 = ssub.s32 1, %s8
  %s11 = scalar_select 0, %s10, %s8
  // Predicated region
  $region2: #{linear_gate_network.1} parent=0 // pred_check
    _
  $region3: #{linear_gate_network.1} parent=0 // pred_check_branch
    %13 = sbr.rel (0) target = $region5
  $region4: #{linear_gate_network.1} parent=0 // pred_region
    _
  $region5: #{linear_gate_network.1} parent=0 // pred_fallthru
    _
  // Predicated region
  $region6: #{linear_gate_network.1} parent=0 // pred_check
    _
  $region7: #{linear_gate_network.1} parent=0 // pred_check_branch
    %15 = sbr.rel (0) target = $region9
  $region8: #{linear_gate_network.1} parent=0 // pred_region
    _
  $region9: #{linear_gate_network.1} parent=0 // pred_fallthru
    _
  // Predicated region
  $region10: #{linear_gate_network.1} parent=0 // pred_check
    _
  $region11: #{linear_gate_network.1} parent=0 // pred_check_branch
    %17 = sbr.rel (0) target = $region13
  $region12: #{linear_gate_network.1} parent=0 // pred_region
    _
  $region13: #{linear_gate_network.1} parent=0 // pred_fallthru
    _
  // Predicated region
  $region14: #{linear_gate_network.1} parent=0 // pred_check
    _
  $region15: #{linear_gate_network.1} parent=0 // pred_check_branch
    %19 = sbr.rel (0) target = $region17
  $region16: #{linear_gate_network.1} parent=0 // pred_region
    _
  $region17: #{linear_gate_network.1} parent=0 // pred_fallthru
    _
  // Predicated region
  $region18: #{linear_gate_network.1} parent=0 // pred_check
    _
  $region19: #{linear_gate_network.1} parent=0 // pred_check_branch
    %21 = sbr.rel (0) target = $region21
  $region20: #{linear_gate_network.1} parent=0 // pred_region
    _
  $region21: #{linear_gate_network.1} parent=0 // pred_fallthru
    _
  %v22 = vld [vmem:[%s0] sm:$0xff]
  %v23 = vld [vmem:[%s2] sm:$0xff]
  %v24 = vld [vmem:[%s2 + $0x8] sm:$0xff]
  %v25 = vld [vmem:[%s1] sm:$0xff]
  %v26 = vld [vmem:[%s3] sm:$0xff]
  %v27 = vld [vmem:[%s3 + $0x8] sm:$0xff]
  %vm28 = vcmask 130048
  %v30 = vsel %vm28, %v25, 0
  %v33 = vsel %vm28, %v26, 0
  %v36 = vsel %vm28, %v27, 0
  %38 = vmatprep.subr.mxu0 0.0
  %39 = vmatpush1.xpose.msra.mxu0 %v33
  %40 = vmatprep.subr.mxu0 0.0
  %41 = vmatpush1.xpose.msra.mxu0 %v36
  %42 = vmatprep.subr.mxu0 0.0
  %43 = vmatpush1.xpose.msra.mxu0 0.0
  %44 = vmatprep.subr.mxu0 0.0
  %45 = vmatpush1.xpose.msra.mxu0 0.0
  %46 = vmatprep.subr.mxu0 0.0
  %47 = vmatpush1.xpose.msra.mxu0 0.0
  %48 = vmatprep.subr.mxu0 0.0
  %49 = vmatpush1.xpose.msra.mxu0 0.0
  %50 = vmatprep.subr.mxu0 0.0
  %51 = vmatpush1.xpose.msra.mxu0 0.0
  %52 = vmatprep.subr.mxu0 0.0
  %53 = vmatpush1.xpose.msra.mxu0 0.0
  %54 = vmatprep.subr.mxu0 0.0
  %55 = vmatpush1.xpose.msra.mxu0 0.0
  %56 = vmatprep.subr.mxu0 0.0
  %57 = vmatpush1.xpose.msra.mxu0 0.0
  %58 = vmatprep.subr.mxu0 0.0
  %59 = vmatpush1.xpose.msra.mxu0 0.0
  %60 = vmatprep.subr.mxu0 0.0
  %61 = vmatpush1.xpose.msra.mxu0 0.0
  %62 = vmatprep.subr.mxu0 0.0
  %63 = vmatpush1.xpose.msra.mxu0 0.0
  %64 = vmatprep.subr.mxu0 0.0
  %65 = vmatpush1.xpose.msra.mxu0 0.0
  %66 = vmatprep.subr.mxu0 0.0
  %67 = vmatpush1.xpose.msra.mxu0 0.0
  %68 = vmatprep.subr.mxu0 0.0
  %69 = vmatpush1.xpose.msra.mxu0 0.0
  %70 = vmatprep.subr.mxu0 0.0
  %71 = vmatpush1.xpose.msra.mxu0 0.0
  %72 = vmatprep.subr.mxu0 0.0
  %73 = vmatpush1.xpose.msra.mxu0 0.0
  %74 = vmatprep.subr.mxu0 0.0
  %75 = vmatpush1.xpose.msra.mxu0 0.0
  %76 = vmatprep.subr.mxu0 0.0
  %77 = vmatpush1.xpose.msra.mxu0 0.0
  %78 = vmatprep.subr.mxu0 0.0
  %79 = vmatpush1.xpose.msra.mxu0 0.0
  %80 = vmatprep.subr.mxu0 0.0
  %81 = vmatpush1.xpose.msra.mxu0 0.0
  %82 = vmatprep.subr.mxu0 0.0
  %83 = vmatpush1.xpose.msra.mxu0 0.0
  %84 = vmatprep.subr.mxu0 0.0
  %85 = vmatpush1.xpose.msra.mxu0 0.0
  %86 = vmatprep.subr.mxu0 0.0
  %87 = vmatpush1.xpose.msra.mxu0 0.0
  %88 = vmatprep.subr.mxu0 0.0
  %89 = vmatpush1.xpose.msra.mxu0 0.0
  %90 = vmatprep.subr.mxu0 0.0
  %91 = vmatpush1.xpose.msra.mxu0 0.0
  %92 = vmatprep.subr.mxu0 0.0
  %93 = vmatpush1.xpose.msra.mxu0 0.0
  %94 = vmatprep.subr.mxu0 0.0
  %95 = vmatpush1.xpose.msra.mxu0 0.0
  %96 = vmatprep.subr.mxu0 0.0
  %97 = vmatpush1.xpose.msra.mxu0 0.0
  %98 = vmatprep.subr.mxu0 0.0
  %99 = vmatpush1.xpose.msra.mxu0 0.0
  %100 = vmatprep.subr.mxu0 0.0
  %101 = vmatpush1.xpose.msra.mxu0 0.0
  %102 = vmatprep.mubr.f32.mxu0 0.0
  %103 = vmatmul.mubr.f32.gmra.mrb[0].mxu0 %v30
  %v104 = vpop.f32.mrb[0].mxu0
  %v105 = vadd.f32 0.0, %v104
  %v106 = vpop.f32.mrb[0].mxu0
  %107 = vdwg.mxu0
  %v109 = vsel %vm28, %v22, 0
  %v112 = vsel %vm28, %v23, 0
  %v115 = vsel %vm28, %v24, 0
  %117 = vmatprep.subr.mxu0 0.0
  %118 = vmatpush1.xpose.msra.mxu0 %v112
  %119 = vmatprep.subr.mxu0 0.0
  %120 = vmatpush1.xpose.msra.mxu0 %v115
  %121 = vmatprep.subr.mxu0 0.0
  %122 = vmatpush1.xpose.msra.mxu0 0.0
  %123 = vmatprep.subr.mxu0 0.0
  %124 = vmatpush1.xpose.msra.mxu0 0.0
  %125 = vmatprep.subr.mxu0 0.0
  %126 = vmatpush1.xpose.msra.mxu0 0.0
  %127 = vmatprep.subr.mxu0 0.0
  %128 = vmatpush1.xpose.msra.mxu0 0.0
  %129 = vmatprep.subr.mxu0 0.0
  %130 = vmatpush1.xpose.msra.mxu0 0.0
  %131 = vmatprep.subr.mxu0 0.0
  %132 = vmatpush1.xpose.msra.mxu0 0.0
  %133 = vmatprep.subr.mxu0 0.0
  %134 = vmatpush1.xpose.msra.mxu0 0.0
  %135 = vmatprep.subr.mxu0 0.0
  %136 = vmatpush1.xpose.msra.mxu0 0.0
  %137 = vmatprep.subr.mxu0 0.0
  %138 = vmatpush1.xpose.msra.mxu0 0.0
  %139 = vmatprep.subr.mxu0 0.0
  %140 = vmatpush1.xpose.msra.mxu0 0.0
  %141 = vmatprep.subr.mxu0 0.0
  %142 = vmatpush1.xpose.msra.mxu0 0.0
  %143 = vmatprep.subr.mxu0 0.0
  %144 = vmatpush1.xpose.msra.mxu0 0.0
  %145 = vmatprep.subr.mxu0 0.0
  %146 = vmatpush1.xpose.msra.mxu0 0.0
  %147 = vmatprep.subr.mxu0 0.0
  %148 = vmatpush1.xpose.msra.mxu0 0.0
  %149 = vmatprep.subr.mxu0 0.0
  %150 = vmatpush1.xpose.msra.mxu0 0.0
  %151 = vmatprep.subr.mxu0 0.0
  %152 = vmatpush1.xpose.msra.mxu0 0.0
  %153 = vmatprep.subr.mxu0 0.0
  %154 = vmatpush1.xpose.msra.mxu0 0.0
  %155 = vmatprep.subr.mxu0 0.0
  %156 = vmatpush1.xpose.msra.mxu0 0.0
  %157 = vmatprep.subr.mxu0 0.0
  %158 = vmatpush1.xpose.msra.mxu0 0.0
  %159 = vmatprep.subr.mxu0 0.0
  %160 = vmatpush1.xpose.msra.mxu0 0.0
  %161 = vmatprep.subr.mxu0 0.0
  %162 = vmatpush1.xpose.msra.mxu0 0.0
  %163 = vmatprep.subr.mxu0 0.0
  %164 = vmatpush1.xpose.msra.mxu0 0.0
  %165 = vmatprep.subr.mxu0 0.0
  %166 = vmatpush1.xpose.msra.mxu0 0.0
  %167 = vmatprep.subr.mxu0 0.0
  %168 = vmatpush1.xpose.msra.mxu0 0.0
  %169 = vmatprep.subr.mxu0 0.0
  %170 = vmatpush1.xpose.msra.mxu0 0.0
  %171 = vmatprep.subr.mxu0 0.0
  %172 = vmatpush1.xpose.msra.mxu0 0.0
  %173 = vmatprep.subr.mxu0 0.0
  %174 = vmatpush1.xpose.msra.mxu0 0.0
  %175 = vmatprep.subr.mxu0 0.0
  %176 = vmatpush1.xpose.msra.mxu0 0.0
  %177 = vmatprep.subr.mxu0 0.0
  %178 = vmatpush1.xpose.msra.mxu0 0.0
  %179 = vmatprep.subr.mxu0 0.0
  %180 = vmatpush1.xpose.msra.mxu0 0.0
  %181 = vmatprep.mubr.f32.mxu0 0.0
  %182 = vmatmul.mubr.f32.gmra.mrb[0].mxu0 %v109
  %v183 = vpop.f32.mrb[0].mxu0
  %v184 = vadd.f32 %v105, %v183
  %v185 = vpop.f32.mrb[0].mxu0
  %186 = vdwg.mxu0
  %v187 = vld [vmem:[%s4] sm:$0x1]
  %v189 = vlaneseq
  %v190 = vshrl.u32 %v189, 7
  %v191 = vsub.s32 0, %v190
  %v192 = vrot.slane %v187, %v191
  %v194 = vadd.f32 %v184, %v192
  %v195 = vsel %vm28, %v194, -inf
  %196 = vmax.xlane.f32.xlu0 %v195
  %v197 = vpop.xlane.xlu0 %196
  %v198 = vsub.f32 %v194, %v197
  %v199 = vmul.f32 %v198, 1.442695
  %v200 = vpow.pop %v199
  %v201 = vsel %vm28, %v200, 0.0
  %202 = vadd.xlane.f32.xlu0 %v201
  %v203 = vpop.xlane.xlu0 %202
  %v204 = vrcp.pop %v203
  %v205 = vmul.f32 %v200, %v204
  %vm206 = vcmask 7168
  %207 = vst.msk [vmem:[%s5] sm:$0xff] %vm206, %v205
  %209 = vrot.lane.b32.xlu0 %v205, 127
  %v210 = vpop.permute.xlu0 %209
  %212 = vst.msk [vmem:[%s6] sm:$0xff] %vm206, %v210
  // Predicated region
  $region22: #{linear_gate_network.1} parent=0 // pred_check
    _
  $region23: #{linear_gate_network.1} parent=0 // pred_check_branch
    %214 = sbr.rel (0) target = $region25
  $region24: #{linear_gate_network.1} parent=0 // pred_region
    _
  $region25: #{linear_gate_network.1} parent=0 // pred_fallthru
    _
  // Predicated region
  $region26: #{linear_gate_network.1} parent=0 // pred_check
    _
  $region27: #{linear_gate_network.1} parent=0 // pred_check_branch
    %216 = sbr.rel (0) target = $region29
  $region28: #{linear_gate_network.1} parent=0 // pred_region
    _
  $region29: #{linear_gate_network.1} parent=0 // pred_fallthru
    _
  // Predicated region
  $region30: #{linear_gate_network.1} parent=0 // pred_check
    _
  $region31: #{linear_gate_network.1} parent=0 // pred_check_branch
    %218 = sbr.rel (0) target = $region33
  $region32: #{linear_gate_network.1} parent=0 // pred_region
    _
  $region33: #{linear_gate_network.1} parent=0 // pred_fallthru
    _
  // Predicated region
  $region34: #{linear_gate_network.1} parent=0 // pred_check
    _
  $region35: #{linear_gate_network.1} parent=0 // pred_check_branch
    %220 = sbr.rel (0) target = $region37
  $region36: #{linear_gate_network.1} parent=0 // pred_region
    _
  $region37: #{linear_gate_network.1} parent=0 // pred_fallthru
    _

</llo_original>
